<compile_context>
chip_gen: v5e
topology: v5e:2x2
jax: 0.10.0
libtpu: 0.0.40
codegen_flags: <defaults>
</compile_context>

<pallas_src>
import jax
import jax.numpy as jnp
from jax.experimental import pallas as pl
from jax.experimental.pallas import tpu as pltpu


def _round_up(x, m):
    return (x + m - 1) // m * m


def prepare_dyt_head_params(wg, bg, wb, bb, compute_dtype=jnp.float32):
    """One-time (init-time) parameter preparation.

    wg/wb: (H, 2H) nn.Linear weights (out_features, in_features); bg/bb: (H,).

    Returns fused, pre-transposed, lane-padded parameters:
      wq: (Hp, 2Hp)  query-input rows, [gamma | beta] output columns
      wc: (Hp, 2Hp)  context-input rows, [gamma | beta] output columns
      b : (1, 2Hp)   [bg | bb], kept f32 (added after the f32 accumulate)
    where Hp = round_up(H, 128).  Zero padding keeps the math exact.
    """
    H = wg.shape[0]
    Hp = _round_up(H, 128)

    wg = wg.astype(jnp.float32)
    wb = wb.astype(jnp.float32)

    def _pad2(w):  # (H, H) -> (Hp, Hp)
        return jnp.pad(w, ((0, Hp - H), (0, Hp - H)))

    def _pad1(b):  # (H,) -> (Hp,)
        return jnp.pad(b.astype(jnp.float32), (0, Hp - H))

    # Split each Linear weight into query-input / ctx-input halves, transpose
    # to (in, out), and fuse gamma & beta along the output (lane) dimension.
    wq_all = jnp.concatenate([_pad2(wg[:, :H].T), _pad2(wb[:, :H].T)], axis=1)
    wc_all = jnp.concatenate([_pad2(wg[:, H:].T), _pad2(wb[:, H:].T)], axis=1)
    b_all = jnp.concatenate([_pad1(bg), _pad1(bb)]).reshape(1, 2 * Hp)

    return dict(
        wq=wq_all.astype(compute_dtype),
        wc=wc_all.astype(compute_dtype),
        b=b_all,                       # biases stay f32
        hidden_dim=H,
    )


def dyt_head_kernel(q_ref, k_ref, wq_ref, wc_ref, b_ref, o_ref):
    # q_ref : (TB, Q, Hp)       k_ref : (TB, K, Hp)
    # wq_ref/wc_ref : (Hp, 2Hp)  b_ref : (1, 2Hp) f32
    tb, q_len, hp = q_ref.shape
    dt = wq_ref.dtype                                 # MXU input dtype (f32 or bf16)

    q = q_ref[...]                                    # (TB, Q, Hp)
    k = k_ref[...]                                    # (TB, K, Hp)

    # key_context = key.mean(dim=1); keep the reduction in f32.
    ctx = jnp.mean(k.astype(jnp.float32), axis=1)     # (TB, Hp)

    # Single fused (TB, Hp) @ (Hp, 2Hp) matmul gives the ctx contribution for
    # BOTH gamma and beta; fold both biases in at the same time -> one resident
    # row per batch element, broadcast over the Q query rows below.
    eff = (
        jnp.dot(ctx.astype(dt), wc_ref[...], preferred_element_type=jnp.float32)
        + b_ref[...]
    )                                                 # (TB, 2Hp) f32

    # Single fused (TB*Q, Hp) @ (Hp, 2Hp) matmul for the query-dependent part
    # of gamma and beta (M = TB*Q rows, N = 2Hp lanes).
    q2 = q.reshape(tb * q_len, hp)
    proj = jnp.dot(q2.astype(dt), wq_ref[...], preferred_element_type=jnp.float32)
    gb = proj.reshape(tb, q_len, 2 * hp) + eff[:, None, :]   # (TB, Q, 2Hp)

    gamma = gb[..., :hp]                              # lane-tile aligned slices
    beta = gb[..., hp:]
    qf = q.astype(jnp.float32)
    o_ref[...] = jnp.tanh(gamma * qf + beta).astype(o_ref.dtype)


def _pick_batch_tile(B, Q, K, Hp, itemsize, max_rows=512,
                     budget_bytes=24 * 1024 * 1024):
    """Largest divisor of B whose double-buffered q/k/out blocks fit a VMEM
    budget and whose matmul M-dim (TB*Q) stays within a reasonable row tile."""
    best = 1
    for tb in range(1, B + 1):
        if B % tb:
            continue
        rows = tb * Q
        blk_bytes = 2 * tb * Hp * (2 * Q + K) * itemsize   # q + out + key, x2 bufs
        if rows <= max(max_rows, Q) and blk_bytes <= budget_bytes:
            best = tb
    return best


def dyt_head(query, key, params):
    """query: (B, Q, H), key: (B, K, H); params from prepare_dyt_head_params."""
    B, Q, H = query.shape
    _, K, _ = key.shape
    assert params["hidden_dim"] == H

    wq, wc, b_all = params["wq"], params["wc"], params["b"]
    Hp = wq.shape[0]

    # Lane-dense layout: pad the hidden dim to a multiple of 128.  This is a
    # no-op when H already is one (typical for real models).
    if Hp != H:
        pad = ((0, 0), (0, 0), (0, Hp - H))
        query_p = jnp.pad(query, pad)
        key_p = jnp.pad(key, pad)
    else:
        query_p, key_p = query, key

    itemsize = jnp.dtype(query.dtype).itemsize
    TB = _pick_batch_tile(B, Q, K, Hp, itemsize)
    grid = (B // TB,)

    # VMEM budgeting: only raise the scoped limit when the footprint demands it.
    w_bytes = (wq.size + wc.size) * jnp.dtype(wq.dtype).itemsize + b_all.size * 4
    blk_bytes = 2 * TB * Hp * (2 * Q + K) * itemsize
    vmem_need = blk_bytes + 2 * w_bytes
    vmem_limit = None
    if vmem_need > 30 * 1024 * 1024:
        vmem_limit = min(int(vmem_need * 5 // 4), 96 * 1024 * 1024)

    flops = 2 * B * Q * Hp * (2 * Hp) + 2 * B * Hp * (2 * Hp) + 4 * B * Q * Hp
    bytes_accessed = (
        query_p.size * itemsize
        + key_p.size * itemsize
        + B * Q * Hp * itemsize
        + w_bytes
    )
    cost = pl.CostEstimate(
        flops=int(flops),
        transcendentals=int(B * Q * Hp),
        bytes_accessed=int(bytes_accessed),
    )

    out_p = pl.pallas_call(
        dyt_head_kernel,
        out_shape=jax.ShapeDtypeStruct((B, Q, Hp), query.dtype),
        grid_spec=pltpu.PrefetchScalarGridSpec(
            num_scalar_prefetch=0,
            grid=grid,
            in_specs=[
                pl.BlockSpec((TB, Q, Hp), lambda i: (i, 0, 0)),    # query tile
                pl.BlockSpec((TB, K, Hp), lambda i: (i, 0, 0)),    # key tile
                pl.BlockSpec((Hp, 2 * Hp), lambda i: (0, 0)),      # Wq_all (shared)
                pl.BlockSpec((Hp, 2 * Hp), lambda i: (0, 0)),      # Wc_all (shared)
                pl.BlockSpec((1, 2 * Hp), lambda i: (0, 0)),       # [bg | bb]
            ],
            out_specs=pl.BlockSpec((TB, Q, Hp), lambda i: (i, 0, 0)),
        ),
        compiler_params=pltpu.CompilerParams(
            dimension_semantics=("parallel",),
            vmem_limit_bytes=vmem_limit,
        ),
        cost_estimate=cost,
    )(query_p, key_p, wq, wc, b_all)

    return out_p[..., :H] if Hp != H else out_p


def dyt_head_ref(query, key, wg, bg, wb, bb):
    """Pure-JAX reference matching the PyTorch forward exactly."""
    ctx = jnp.mean(key, axis=1, keepdims=True)                 # (B, 1, H)
    ctx = jnp.broadcast_to(ctx, query.shape)                   # (B, Q, H)
    combined = jnp.concatenate([query, ctx], axis=-1)          # (B, Q, 2H)
    gamma = combined @ wg.T + bg
    beta = combined @ wb.T + bb
    return jnp.tanh(gamma * query + beta)


if __name__ == "__main__":
    B, Q, K, H = 2, 8, 8, 32

    key0 = jax.random.PRNGKey(0)
    k_q, k_k, k_wg, k_bg, k_wb, k_bb = jax.random.split(key0, 6)

    query = jax.random.normal(k_q, (B, Q, H), dtype=jnp.float32)
    key_in = jax.random.normal(k_k, (B, K, H), dtype=jnp.float32)

    # Deterministic parameter init (uniform, roughly matching nn.Linear scale).
    bound = 1.0 / jnp.sqrt(2.0 * H)
    wg = jax.random.uniform(k_wg, (H, 2 * H), jnp.float32, -bound, bound)
    bg = jax.random.uniform(k_bg, (H,), jnp.float32, -bound, bound)
    wb = jax.random.uniform(k_wb, (H, 2 * H), jnp.float32, -bound, bound)
    bb = jax.random.uniform(k_bb, (H,), jnp.float32, -bound, bound)

    ref = dyt_head_ref(query, key_in, wg, bg, wb, bb)

    # Exact path: f32 MXU inputs.
    params_f32 = prepare_dyt_head_params(wg, bg, wb, bb, compute_dtype=jnp.float32)
    out = jax.block_until_ready(dyt_head(query, key_in, params_f32))
    assert out.shape == (B, Q, H)
    assert jnp.allclose(out, ref, atol=1e-5, rtol=1e-5), "f32 kernel mismatch vs reference"

    # Fast path: bf16 weights/activations on the MXU, f32 accumulate + f32 epilogue.
    params_bf16 = prepare_dyt_head_params(wg, bg, wb, bb, compute_dtype=jnp.bfloat16)
    out_bf = jax.block_until_ready(dyt_head(query, key_in, params_bf16))
    assert out_bf.shape == (B, Q, H)
    assert jnp.allclose(out_bf, ref, atol=3e-2, rtol=3e-2), "bf16 kernel mismatch vs reference"

    print("KERNEL_OK")
</pallas_src>

<mosaic_0001>
module attributes {stable_mosaic.version = 11 : i64} {
  func.func @dyt_head_kernel(%arg0: i32, %arg1: memref<2x8x128xf32, #tpu.memory_space<vmem>>, %arg2: memref<2x8x128xf32, #tpu.memory_space<vmem>>, %arg3: memref<128x256xf32, #tpu.memory_space<vmem>>, %arg4: memref<128x256xf32, #tpu.memory_space<vmem>>, %arg5: memref<1x256xf32, #tpu.memory_space<vmem>>, %arg6: memref<2x8x128xf32, #tpu.memory_space<vmem>>) attributes {dimension_semantics = [#tpu.dimension_semantics<parallel>], iteration_bounds = array<i64: 1>, scalar_prefetch = 0 : i64, scratch_operands = 0 : i64, tpu.core_type = #tpu.core_type<tc>, window_params = [{transform_indices = @transform_0, window_bounds = array<i64: 2, 8, 128>}, {transform_indices = @transform_1, window_bounds = array<i64: 2, 8, 128>}, {pipeline_mode = #tpu.pipeline_mode<synchronous>, transform_indices = @transform_2, window_bounds = array<i64: 128, 256>}, {pipeline_mode = #tpu.pipeline_mode<synchronous>, transform_indices = @transform_3, window_bounds = array<i64: 128, 256>}, {pipeline_mode = #tpu.pipeline_mode<synchronous>, transform_indices = @transform_4, window_bounds = array<i64: 1, 256>}, {transform_indices = @transform_5, window_bounds = array<i64: 2, 8, 128>}]} {
    %c0 = arith.constant 0 : index
    %c0_0 = arith.constant 0 : index
    %c0_1 = arith.constant 0 : index
    %0 = vector.load %arg1[%c0, %c0_0, %c0_1] : memref<2x8x128xf32, #tpu.memory_space<vmem>>, vector<2x8x128xf32>
    %c0_2 = arith.constant 0 : index
    %c0_3 = arith.constant 0 : index
    %c0_4 = arith.constant 0 : index
    %1 = vector.load %arg2[%c0_2, %c0_3, %c0_4] : memref<2x8x128xf32, #tpu.memory_space<vmem>>, vector<2x8x128xf32>
    %cst = arith.constant dense<0.000000e+00> : vector<2x128xf32>
    %2 = vector.multi_reduction <add>, %1, %cst [1] : vector<2x8x128xf32> to vector<2x128xf32>
    %cst_5 = arith.constant 8.000000e+00 : f32
    %3 = vector.broadcast %cst_5 : f32 to vector<2x128xf32>
    %4 = arith.divf %2, %3 : vector<2x128xf32>
    %c0_6 = arith.constant 0 : index
    %c0_7 = arith.constant 0 : index
    %5 = vector.load %arg4[%c0_6, %c0_7] : memref<128x256xf32, #tpu.memory_space<vmem>>, vector<128x256xf32>
    %cst_8 = arith.constant dense<0.000000e+00> : vector<2x256xf32>
    %6 = tpu.matmul %4, %5, %cst_8 {dimension_numbers = #tpu.dot_dimension_numbers<[1], [0], [0], [1], [0, 0, 1, 1], [], []>} : vector<2x128xf32>, vector<128x256xf32>, vector<2x256xf32> -> vector<2x256xf32>
    %c0_9 = arith.constant 0 : index
    %c0_10 = arith.constant 0 : index
    %7 = vector.load %arg5[%c0_9, %c0_10] : memref<1x256xf32, #tpu.memory_space<vmem>>, vector<1x256xf32>
    %8 = vector.broadcast %7 : vector<1x256xf32> to vector<2x256xf32>
    %9 = arith.addf %6, %8 : vector<2x256xf32>
    %10 = vector.shape_cast %0 : vector<2x8x128xf32> to vector<16x128xf32>
    %c0_11 = arith.constant 0 : index
    %c0_12 = arith.constant 0 : index
    %11 = vector.load %arg3[%c0_11, %c0_12] : memref<128x256xf32, #tpu.memory_space<vmem>>, vector<128x256xf32>
    %cst_13 = arith.constant dense<0.000000e+00> : vector<16x256xf32>
    %12 = tpu.matmul %10, %11, %cst_13 {dimension_numbers = #tpu.dot_dimension_numbers<[1], [0], [0], [1], [0, 0, 1, 1], [], []>} : vector<16x128xf32>, vector<128x256xf32>, vector<16x256xf32> -> vector<16x256xf32>
    %13 = vector.shape_cast %12 : vector<16x256xf32> to vector<2x8x256xf32>
    %14 = vector.shape_cast %9 : vector<2x256xf32> to vector<2x1x256xf32>
    %15 = vector.broadcast %14 : vector<2x1x256xf32> to vector<2x8x256xf32>
    %16 = arith.addf %13, %15 : vector<2x8x256xf32>
    %17 = vector.extract_strided_slice %16 {offsets = [0, 0, 0], sizes = [2, 8, 128], strides = [1, 1, 1]} : vector<2x8x256xf32> to vector<2x8x128xf32>
    %18 = vector.extract_strided_slice %16 {offsets = [0, 0, 128], sizes = [2, 8, 128], strides = [1, 1, 1]} : vector<2x8x256xf32> to vector<2x8x128xf32>
    %19 = arith.mulf %17, %0 : vector<2x8x128xf32>
    %20 = arith.addf %19, %18 : vector<2x8x128xf32>
    %21 = math.tanh %20 : vector<2x8x128xf32>
    %c0_14 = arith.constant 0 : index
    %c0_15 = arith.constant 0 : index
    %c0_16 = arith.constant 0 : index
    %22 = vector.load %arg6[%c0_14, %c0_15, %c0_16] : memref<2x8x128xf32, #tpu.memory_space<vmem>>, vector<2x8x128xf32>
    tpu.vector_store %arg6[%c0_14, %c0_15, %c0_16], %21 {strides = array<i32>} : memref<2x8x128xf32, #tpu.memory_space<vmem>>, vector<2x8x128xf32>,
    return
  }
  func.func @transform_0(%arg0: i32) -> (i32, i32, i32) {
    %c0_i32 = arith.constant 0 : i32
    %c0_i32_0 = arith.constant 0 : i32
    %c0_i32_1 = arith.constant 0 : i32
    return %arg0, %c0_i32, %c0_i32_0 : i32, i32, i32
  }
  func.func @transform_1(%arg0: i32) -> (i32, i32, i32) {
    %c0_i32 = arith.constant 0 : i32
    %c0_i32_0 = arith.constant 0 : i32
    %c0_i32_1 = arith.constant 0 : i32
    return %arg0, %c0_i32, %c0_i32_0 : i32, i32, i32
  }
  func.func @transform_2(%arg0: i32) -> (i32, i32) {
    %c0_i32 = arith.constant 0 : i32
    %c0_i32_0 = arith.constant 0 : i32
    %c0_i32_1 = arith.constant 0 : i32
    return %c0_i32, %c0_i32_0 : i32, i32
  }
  func.func @transform_3(%arg0: i32) -> (i32, i32) {
    %c0_i32 = arith.constant 0 : i32
    %c0_i32_0 = arith.constant 0 : i32
    %c0_i32_1 = arith.constant 0 : i32
    return %c0_i32, %c0_i32_0 : i32, i32
  }
  func.func @transform_4(%arg0: i32) -> (i32, i32) {
    %c0_i32 = arith.constant 0 : i32
    %c0_i32_0 = arith.constant 0 : i32
    %c0_i32_1 = arith.constant 0 : i32
    return %c0_i32, %c0_i32_0 : i32, i32
  }
  func.func @transform_5(%arg0: i32) -> (i32, i32, i32) {
    %c0_i32 = arith.constant 0 : i32
    %c0_i32_0 = arith.constant 0 : i32
    %c0_i32_1 = arith.constant 0 : i32
    return %arg0, %c0_i32, %c0_i32_0 : i32, i32, i32
  }
}

</mosaic_0001>

<llo_original>
// kernel: tpu_custom_call.1
$region0: #{tpu_custom_call.1}
  #allocation0 [shape = 'u32[]', space=smem, size = 0x4, offset = 0x4, fixed_abs, tag = 'smem constant byte address 0x4 - core index']
  #allocation1 [shape = 'u32[72,128]{1,0:T(1,128)}', space=vmem, size = 0x9000, scoped, tag = 'internal scratch']
  %s0 = inlined_call_operand.hbm [shape: f32[2,8,128], index: 0, kind: input, shape index: {}]
  %s1 = inlined_call_operand.hbm [shape: f32[2,8,128], index: 1, kind: input, shape index: {}]
  %s2 = inlined_call_operand.hbm [shape: f32[128,256], index: 2, kind: input, shape index: {}]
  %s3 = inlined_call_operand.hbm [shape: f32[128,256], index: 3, kind: input, shape index: {}]
  %s4 = inlined_call_operand.vmem [shape: f32[1,256], index: 4, kind: input, shape index: {}]
  %s5 = inlined_call_operand.hbm [shape: f32[2,8,128], index: 5, kind: output, shape index: {}]
  %s6 = sld [smem:[#allocation0]]
  $region46: #{tpu_custom_call.1} parent=0
    _
  %s8 = ssub.s32 1, %s6
  %s9 = scalar_select 0, %s8, %s6
  $region1: #{tpu_custom_call.1} parent=0
    #allocation2 [shape = 'u8[8192]{0}', space=vmem, size = 0x2000, scoped, tag = 'input window, operand 0, single buffered']
    #allocation3 [shape = 's32[1]{0}', space=sflag, size = 0x4, scoped, tag = 'scoped memory for tpu_custom_call.1']
    #allocation4 [shape = 's32[1]{0}', space=sflag, size = 0x4, scoped, tag = 'scoped memory for tpu_custom_call.1']
    #allocation5 [shape = 'u8[8192]{0}', space=vmem, size = 0x2000, scoped, tag = 'input window, operand 1, single buffered']
    #allocation6 [shape = 's32[1]{0}', space=sflag, size = 0x4, scoped, tag = 'scoped memory for tpu_custom_call.1']
    #allocation7 [shape = 'u8[131072]{0}', space=vmem, size = 0x20000, scoped, tag = 'input window, operand 2, single buffered']
    #allocation8 [shape = 'u8[131072]{0}', space=vmem, size = 0x20000, scoped, tag = 'input window, operand 3, single buffered']
    #allocation9 [shape = 's32[1]{0}', space=sflag, size = 0x4, scoped, tag = 'scoped memory for tpu_custom_call.1']
    #allocation10 [shape = 'u8[8192]{0}', space=vmem, size = 0x2000, scoped, tag = 'output window, operand 0, single buffered']
    %10 = vsyncpa [#allocation3], 0
    %11 = vsyncpa [#allocation6], 0
    %12 = vsyncpa [#allocation9], 0
    %13 = vsyncpa [#allocation4], 0
    // Predicated region
    $region2: #{tpu_custom_call.1} parent=1 // pred_check
      _
    $region3: #{tpu_custom_call.1} parent=1 // pred_check_branch
      %15 = sbr.rel (0) target = $region5
    $region4: #{tpu_custom_call.1} parent=1 // pred_region
      %17 = vsyncadd [#allocation3], 0
      %s18 = sshll.u32 %s0, 4
      %s19 = int_to_ptr.hbm [resolvable:$true] %s18
      %s20 = sshll.u32 [#allocation2], 4
      %s21 = int_to_ptr.vmem [resolvable:$true] %s20
      %26 = dma.hbm_to_vmem [thread:$0]  %s19, 256, %s21, [#allocation3], 128, 128, 8
    $region5: #{tpu_custom_call.1} parent=1 // pred_fallthru
      _
    // Predicated region
    $region6: #{tpu_custom_call.1} parent=1 // pred_check
      _
    $region7: #{tpu_custom_call.1} parent=1 // pred_check_branch
      %28 = sbr.rel (0) target = $region9
    $region8: #{tpu_custom_call.1} parent=1 // pred_region
      %30 = vsyncadd [#allocation6], 0
      %s31 = sshll.u32 %s1, 4
      %s32 = int_to_ptr.hbm [resolvable:$true] %s31
      %s33 = sshll.u32 [#allocation5], 4
      %s34 = int_to_ptr.vmem [resolvable:$true] %s33
      %39 = dma.hbm_to_vmem [thread:$0]  %s32, 256, %s34, [#allocation6], 128, 128, 8
    $region9: #{tpu_custom_call.1} parent=1 // pred_fallthru
      _
    // Predicated region
    $region10: #{tpu_custom_call.1} parent=1 // pred_check
      _
    $region11: #{tpu_custom_call.1} parent=1 // pred_check_branch
      %41 = sbr.rel (0) target = $region13
    $region12: #{tpu_custom_call.1} parent=1 // pred_region
      %43 = vsyncadd [#allocation6], 0
      %s44 = sshll.u32 %s2, 4
      %s45 = int_to_ptr.hbm [resolvable:$true] %s44
      %s46 = sshll.u32 [#allocation7], 4
      %s47 = int_to_ptr.vmem [resolvable:$true] %s46
      %52 = dma.hbm_to_vmem [thread:$0]  %s45, 4096, %s47, [#allocation6], 256, 256, 16
    $region13: #{tpu_custom_call.1} parent=1 // pred_fallthru
      _
    // Predicated region
    $region14: #{tpu_custom_call.1} parent=1 // pred_check
      _
    $region15: #{tpu_custom_call.1} parent=1 // pred_check_branch
      %54 = sbr.rel (0) target = $region17
    $region16: #{tpu_custom_call.1} parent=1 // pred_region
      %56 = vsyncadd [#allocation9], 0
      %s57 = sshll.u32 %s3, 4
      %s58 = int_to_ptr.hbm [resolvable:$true] %s57
      %s59 = sshll.u32 [#allocation8], 4
      %s60 = int_to_ptr.vmem [resolvable:$true] %s59
      %65 = dma.hbm_to_vmem [thread:$0]  %s58, 4096, %s60, [#allocation9], 256, 256, 16
    $region17: #{tpu_custom_call.1} parent=1 // pred_fallthru
      _
    // Predicated region
    $region18: #{tpu_custom_call.1} parent=1 // pred_check
      _
    $region19: #{tpu_custom_call.1} parent=1 // pred_check_branch
      %67 = sbr.rel (0) target = $region21
    $region20: #{tpu_custom_call.1} parent=1 // pred_region
      _
    $region21: #{tpu_custom_call.1} parent=1 // pred_fallthru
      _
    // Predicated region
    $region22: #{tpu_custom_call.1} parent=1 // pred_check
      _
    $region23: #{tpu_custom_call.1} parent=1 // pred_check_branch
      %69 = sbr.rel (0) target = $region25
    $region24: #{tpu_custom_call.1} parent=1 // pred_region
      %71 = dma.done [#allocation3], 256
    $region25: #{tpu_custom_call.1} parent=1 // pred_fallthru
      _
    // Predicated region
    $region26: #{tpu_custom_call.1} parent=1 // pred_check
      _
    $region27: #{tpu_custom_call.1} parent=1 // pred_check_branch
      %73 = sbr.rel (0) target = $region29
    $region28: #{tpu_custom_call.1} parent=1 // pred_region
      %75 = dma.done [#allocation6], 256
    $region29: #{tpu_custom_call.1} parent=1 // pred_fallthru
      _
    // Predicated region
    $region30: #{tpu_custom_call.1} parent=1 // pred_check
      _
    $region31: #{tpu_custom_call.1} parent=1 // pred_check_branch
      %77 = sbr.rel (0) target = $region33
    $region32: #{tpu_custom_call.1} parent=1 // pred_region
      %79 = dma.done [#allocation6], 4096
    $region33: #{tpu_custom_call.1} parent=1 // pred_fallthru
      _
    // Predicated region
    $region34: #{tpu_custom_call.1} parent=1 // pred_check
      _
    $region35: #{tpu_custom_call.1} parent=1 // pred_check_branch
      %81 = sbr.rel (0) target = $region37
    $region36: #{tpu_custom_call.1} parent=1 // pred_region
      %83 = dma.done [#allocation9], 4096
    $region37: #{tpu_custom_call.1} parent=1 // pred_fallthru
      _
    %v84 = vld [vmem:[#allocation2] sm:$0xff]
    %v85 = vld [vmem:[#allocation2 + $0x8] sm:$0xff]
    %v86 = vld [vmem:[#allocation5] sm:$0xff]
    %v87 = vld [vmem:[#allocation5 + $0x8] sm:$0xff]
    %v88 = vrot.slane %v86, 4
    %v89 = vadd.f32 %v86, %v88
    %v90 = vrot.slane %v89, 2
    %v91 = vadd.f32 %v89, %v90
    %v92 = vrot.slane %v91, 1
    %v93 = vadd.f32 %v91, %v92
    %v94 = vrot.slane %v87, 4
    %v95 = vadd.f32 %v87, %v94
    %v96 = vrot.slane %v95, 2
    %v97 = vadd.f32 %v95, %v96
    %v98 = vrot.slane %v97, 1
    %v99 = vadd.f32 %v97, %v98
    %v100 = vrcp.pop 8.0
    %v101 = vmul.f32 8.0, %v100
    %v102 = vsub.f32 1.0, %v101
    %v103 = vmul.f32 %v100, %v102
    %v104 = vadd.f32 %v100, %v103
    %vm105 = vweird.f32 %v100
    %v106 = vsel %vm105, %v100, %v104
    %v107 = vmul.f32 %v93, %v106
    %v108 = vmul.f32 %v99, %v106
    %v109 = vld [vmem:[#allocation8] sm:$0xff]
    %v110 = vld [vmem:[#allocation8 + $0x8] sm:$0xff]
    %v111 = vld [vmem:[#allocation8 + $0x10] sm:$0xff]
    %v112 = vld [vmem:[#allocation8 + $0x18] sm:$0xff]
    %v113 = vld [vmem:[#allocation8 + $0x20] sm:$0xff]
    %v114 = vld [vmem:[#allocation8 + $0x28] sm:$0xff]
    %v115 = vld [vmem:[#allocation8 + $0x30] sm:$0xff]
    %v116 = vld [vmem:[#allocation8 + $0x38] sm:$0xff]
    %v117 = vld [vmem:[#allocation8 + $0x40] sm:$0xff]
    %v118 = vld [vmem:[#allocation8 + $0x48] sm:$0xff]
    %v119 = vld [vmem:[#allocation8 + $0x50] sm:$0xff]
    %v120 = vld [vmem:[#allocation8 + $0x58] sm:$0xff]
    %v121 = vld [vmem:[#allocation8 + $0x60] sm:$0xff]
    %v122 = vld [vmem:[#allocation8 + $0x68] sm:$0xff]
    %v123 = vld [vmem:[#allocation8 + $0x70] sm:$0xff]
    %v124 = vld [vmem:[#allocation8 + $0x78] sm:$0xff]
    %v125 = vld [vmem:[#allocation8 + $0x80] sm:$0xff]
    %v126 = vld [vmem:[#allocation8 + $0x88] sm:$0xff]
    %v127 = vld [vmem:[#allocation8 + $0x90] sm:$0xff]
    %v128 = vld [vmem:[#allocation8 + $0x98] sm:$0xff]
    %v129 = vld [vmem:[#allocation8 + $0xa0] sm:$0xff]
    %v130 = vld [vmem:[#allocation8 + $0xa8] sm:$0xff]
    %v131 = vld [vmem:[#allocation8 + $0xb0] sm:$0xff]
    %v132 = vld [vmem:[#allocation8 + $0xb8] sm:$0xff]
    %v133 = vld [vmem:[#allocation8 + $0xc0] sm:$0xff]
    %v134 = vld [vmem:[#allocation8 + $0xc8] sm:$0xff]
    %v135 = vld [vmem:[#allocation8 + $0xd0] sm:$0xff]
    %v136 = vld [vmem:[#allocation8 + $0xd8] sm:$0xff]
    %v137 = vld [vmem:[#allocation8 + $0xe0] sm:$0xff]
    %v138 = vld [vmem:[#allocation8 + $0xe8] sm:$0xff]
    %v139 = vld [vmem:[#allocation8 + $0xf0] sm:$0xff]
    %v140 = vld [vmem:[#allocation8 + $0xf8] sm:$0xff]
    %v141 = vld [vmem:[%s4] sm:$0x3]
    %v143 = vperm.slane %v141, 0
    %v144 = vperm.slane %v141, 1
    %vm149 = vcmask 1041409
    %v150 = vsel %vm149, %v108, %v107
    %152 = vmatpush.msra.mxu0 %v139
    %153 = vmatpush.msra.mxu0 %v137
    %154 = vmatpush.msra.mxu0 %v135
    %155 = vmatpush.msra.mxu0 %v133
    %156 = vmatpush.msra.mxu0 %v131
    %157 = vmatpush.msra.mxu0 %v129
    %158 = vmatpush.msra.mxu0 %v127
    %159 = vmatpush.msra.mxu0 %v125
    %160 = vmatpush.msra.mxu0 %v123
    %161 = vmatpush.msra.mxu0 %v121
    %162 = vmatpush.msra.mxu0 %v119
    %163 = vmatpush.msra.mxu0 %v117
    %164 = vmatpush.msra.mxu0 %v115
    %165 = vmatpush.msra.mxu0 %v113
    %166 = vmatpush.msra.mxu0 %v111
    %167 = vmatpush.msra.mxu0 %v109
    %168 = vmatmul.f32.gmra.mxu0 %v150
    %v169 = vpop.f32.mrf.mxu0
    %v170 = vadd.f32 %v143, %v169
    %171 = vdwg.mxu0
    %172 = vmatpush.msra.mxu0 %v140
    %173 = vmatpush.msra.mxu0 %v138
    %174 = vmatpush.msra.mxu0 %v136
    %175 = vmatpush.msra.mxu0 %v134
    %176 = vmatpush.msra.mxu0 %v132
    %177 = vmatpush.msra.mxu0 %v130
    %178 = vmatpush.msra.mxu0 %v128
    %179 = vmatpush.msra.mxu0 %v126
    %180 = vmatpush.msra.mxu0 %v124
    %181 = vmatpush.msra.mxu0 %v122
    %182 = vmatpush.msra.mxu0 %v120
    %183 = vmatpush.msra.mxu0 %v118
    %184 = vmatpush.msra.mxu0 %v116
    %185 = vmatpush.msra.mxu0 %v114
    %186 = vmatpush.msra.mxu0 %v112
    %187 = vmatpush.msra.mxu0 %v110
    %188 = vmatmul.f32.gmra.mxu0 %v150
    %v189 = vpop.f32.mrf.mxu0
    %v190 = vadd.f32 %v144, %v189
    %191 = vdwg.mxu0
    %v192 = vld [vmem:[#allocation7] sm:$0xff]
    %v193 = vld [vmem:[#allocation7 + $0x8] sm:$0xff]
    %v194 = vld [vmem:[#allocation7 + $0x10] sm:$0xff]
    %v195 = vld [vmem:[#allocation7 + $0x18] sm:$0xff]
    %v196 = vld [vmem:[#allocation7 + $0x20] sm:$0xff]
    %v197 = vld [vmem:[#allocation7 + $0x28] sm:$0xff]
    %v198 = vld [vmem:[#allocation7 + $0x30] sm:$0xff]
    %v199 = vld [vmem:[#allocation7 + $0x38] sm:$0xff]
    %v200 = vld [vmem:[#allocation7 + $0x40] sm:$0xff]
    %v201 = vld [vmem:[#allocation7 + $0x48] sm:$0xff]
    %v202 = vld [vmem:[#allocation7 + $0x50] sm:$0xff]
    %v203 = vld [vmem:[#allocation7 + $0x58] sm:$0xff]
    %v204 = vld [vmem:[#allocation7 + $0x60] sm:$0xff]
    %v205 = vld [vmem:[#allocation7 + $0x68] sm:$0xff]
    %v206 = vld [vmem:[#allocation7 + $0x70] sm:$0xff]
    %v207 = vld [vmem:[#allocation7 + $0x78] sm:$0xff]
    %v208 = vld [vmem:[#allocation7 + $0x80] sm:$0xff]
    %v209 = vld [vmem:[#allocation7 + $0x88] sm:$0xff]
    %v210 = vld [vmem:[#allocation7 + $0x90] sm:$0xff]
    %v211 = vld [vmem:[#allocation7 + $0x98] sm:$0xff]
    %v212 = vld [vmem:[#allocation7 + $0xa0] sm:$0xff]
    %v213 = vld [vmem:[#allocation7 + $0xa8] sm:$0xff]
    %v214 = vld [vmem:[#allocation7 + $0xb0] sm:$0xff]
    %v215 = vld [vmem:[#allocation7 + $0xb8] sm:$0xff]
    %v216 = vld [vmem:[#allocation7 + $0xc0] sm:$0xff]
    %v217 = vld [vmem:[#allocation7 + $0xc8] sm:$0xff]
    %v218 = vld [vmem:[#allocation7 + $0xd0] sm:$0xff]
    %v219 = vld [vmem:[#allocation7 + $0xd8] sm:$0xff]
    %v220 = vld [vmem:[#allocation7 + $0xe0] sm:$0xff]
    %v221 = vld [vmem:[#allocation7 + $0xe8] sm:$0xff]
    %v222 = vld [vmem:[#allocation7 + $0xf0] sm:$0xff]
    %v223 = vld [vmem:[#allocation7 + $0xf8] sm:$0xff]
    %224 = vmatpush.msra.mxu0 %v222
    %225 = vmatpush.msra.mxu0 %v220
    %226 = vmatpush.msra.mxu0 %v218
    %227 = vmatpush.msra.mxu0 %v216
    %228 = vmatpush.msra.mxu0 %v214
    %229 = vmatpush.msra.mxu0 %v212
    %230 = vmatpush.msra.mxu0 %v210
    %231 = vmatpush.msra.mxu0 %v208
    %232 = vmatpush.msra.mxu0 %v206
    %233 = vmatpush.msra.mxu0 %v204
    %234 = vmatpush.msra.mxu0 %v202
    %235 = vmatpush.msra.mxu0 %v200
    %236 = vmatpush.msra.mxu0 %v198
    %237 = vmatpush.msra.mxu0 %v196
    %238 = vmatpush.msra.mxu0 %v194
    %239 = vmatpush.msra.mxu0 %v192
    %240 = vmatmul.f32.gmra.mxu0 %v84
    %v241 = vpop.f32.mrf.mxu0
    %v242 = vadd.f32 0.0, %v241
    %243 = vmatmul.f32.gmra.mxu0 %v85
    %v244 = vpop.f32.mrf.mxu0
    %v245 = vadd.f32 0.0, %v244
    %246 = vdwg.mxu0
    %247 = vmatpush.msra.mxu0 %v223
    %248 = vmatpush.msra.mxu0 %v221
    %249 = vmatpush.msra.mxu0 %v219
    %250 = vmatpush.msra.mxu0 %v217
    %251 = vmatpush.msra.mxu0 %v215
    %252 = vmatpush.msra.mxu0 %v213
    %253 = vmatpush.msra.mxu0 %v211
    %254 = vmatpush.msra.mxu0 %v209
    %255 = vmatpush.msra.mxu0 %v207
    %256 = vmatpush.msra.mxu0 %v205
    %257 = vmatpush.msra.mxu0 %v203
    %258 = vmatpush.msra.mxu0 %v201
    %259 = vmatpush.msra.mxu0 %v199
    %260 = vmatpush.msra.mxu0 %v197
    %261 = vmatpush.msra.mxu0 %v195
    %262 = vmatpush.msra.mxu0 %v193
    %263 = vmatmul.f32.gmra.mxu0 %v84
    %v264 = vpop.f32.mrf.mxu0
    %v265 = vadd.f32 0.0, %v264
    %266 = vmatmul.f32.gmra.mxu0 %v85
    %v267 = vpop.f32.mrf.mxu0
    %v268 = vadd.f32 0.0, %v267
    %269 = vdwg.mxu0
    %v272 = vrot.slane %v190, 7
    %vm273 = vcmask 1040384
    %v274 = vsel %vm273, %v170, %v272
    %v275 = vsel %vm149, %v170, %v272
    %v276 = vrot.slane %v275, 1
    %v277 = vperm.slane %v274, 0
    %v278 = vperm.slane %v274, 1
    %v279 = vperm.slane %v276, 0
    %v280 = vperm.slane %v276, 1
    %v285 = vadd.f32 %v242, %v277
    %v286 = vadd.f32 %v265, %v278
    %v287 = vadd.f32 %v245, %v279
    %v288 = vadd.f32 %v268, %v280
    %v289 = vmul.f32 %v285, %v84
    %v290 = vmul.f32 %v287, %v85
    %v291 = vadd.f32 %v289, %v286
    %v292 = vadd.f32 %v290, %v288
    %v293 = vtanh.pop %v291
    %v294 = vtanh.pop %v292
    %295 = vst [vmem:[#allocation10] sm:$0xff] %v293
    %296 = vst [vmem:[#allocation10 + $0x8] sm:$0xff] %v294
    // Predicated region
    $region38: #{tpu_custom_call.1} parent=1 // pred_check
      _
    $region39: #{tpu_custom_call.1} parent=1 // pred_check_branch
      %298 = sbr.rel (0) target = $region41
    $region40: #{tpu_custom_call.1} parent=1 // pred_region
      %300 = vsyncadd [#allocation4], 0
      %s301 = sshll.u32 [#allocation10], 4
      %s302 = int_to_ptr.vmem [resolvable:$true] %s301
      %s303 = sshll.u32 %s5, 4
      %s304 = int_to_ptr.hbm [resolvable:$true] %s303
      %309 = dma.vmem_to_hbm [thread:$0]  %s302, 256, %s304, [#allocation4], 128, 128, 8
    $region41: #{tpu_custom_call.1} parent=1 // pred_fallthru
      _
    // Predicated region
    $region42: #{tpu_custom_call.1} parent=1 // pred_check
      _
    $region43: #{tpu_custom_call.1} parent=1 // pred_check_branch
      %311 = sbr.rel (0) target = $region45
    $region44: #{tpu_custom_call.1} parent=1 // pred_region
      %313 = dma.done [#allocation4], 256
    $region45: #{tpu_custom_call.1} parent=1 // pred_fallthru
      _
    %314 = vsyncpa [#allocation3], 1
    %315 = vsyncpa [#allocation6], 1
    %316 = vsyncpa [#allocation9], 1
    %317 = vsyncpa [#allocation4], 1

</llo_original>
